<compile_context>
chip_gen: v7x
topology: tpu7x:2x2x1
jax: 0.10.0
libtpu: 0.0.40
codegen_flags: <defaults>
</compile_context>

<pallas_src>
import math
import functools

import jax
import jax.numpy as jnp
from jax import lax
from jax.experimental import pallas as pl
from jax.experimental.pallas import tpu as pltpu


# ------------------------- generation-aware budgets --------------------------

def _tpu_vmem_capacity_bytes():
    """Physical VMEM per core; conservative fallback if the query fails."""
    try:
        info = pltpu.get_tpu_info()
        cap = getattr(info, "vmem_capacity_bytes", None)
        if cap:
            return int(cap)
    except Exception:
        pass
    return 64 * 1024 * 1024          # v7x per-TensorCore VMEM (smallest current gen)


_VMEM_CAP = _tpu_vmem_capacity_bytes()
_VMEM_LIMIT = min((_VMEM_CAP * 3) // 4, 112 * 1024 * 1024)   # headroom for compiler
_BIG_VMEM = _VMEM_CAP >= 96 * 1024 * 1024                    # v5e / v6e (128 MiB)
_LIN_TILE_MN = (512, 256, 128) if _BIG_VMEM else (256, 128)
_LIN_TILE_K = (512, 256, 128)
# K+V resident in VMEM when they fit this budget (collapses the kv grid axis).
_KV_RESIDENT_BUDGET = (24 if _BIG_VMEM else 8) * 1024 * 1024


def _pick_tile(dim, candidates):
    """Largest candidate tile that evenly divides `dim`; else full extent."""
    for c in candidates:
        if dim >= c and dim % c == 0:
            return c
    return dim


# ----------------------------- tiled linear ----------------------------------

def _linear_kernel(x_ref, w_ref, b_ref, o_ref, acc_ref, *, mxu_dtype):
    k = pl.program_id(2)

    @pl.when(k == 0)
    def _():
        acc_ref[...] = jnp.zeros_like(acc_ref)

    acc_ref[...] += jnp.dot(
        x_ref[...].astype(mxu_dtype),          # no-op when x is already bf16
        w_ref[...],                            # weights are pre-cast once on host
        preferred_element_type=jnp.float32,
    )

    @pl.when(k == pl.num_programs(2) - 1)
    def _():
        o_ref[...] = (acc_ref[...] + b_ref[...]).astype(o_ref.dtype)


def linear(x2d, w_t, b, *, out_dtype=jnp.float32):
    """y = x2d @ w_t + b.   x2d: (M, K), w_t: (K, N) pre-transposed/cast, b: (N,)."""
    M, K = x2d.shape
    K2, N = w_t.shape
    assert K == K2
    tm = _pick_tile(M, _LIN_TILE_MN)
    tn = _pick_tile(N, _LIN_TILE_MN)
    tk = _pick_tile(K, _LIN_TILE_K)
    b2d = b.reshape(1, N).astype(jnp.float32)
    kern = functools.partial(_linear_kernel, mxu_dtype=w_t.dtype)
    return pl.pallas_call(
        kern,
        out_shape=jax.ShapeDtypeStruct((M, N), out_dtype),
        grid_spec=pltpu.PrefetchScalarGridSpec(
            num_scalar_prefetch=0,
            grid=(M // tm, N // tn, K // tk),
            in_specs=[
                pl.BlockSpec((tm, tk), lambda i, j, k: (i, k)),
                pl.BlockSpec((tk, tn), lambda i, j, k: (k, j)),
                pl.BlockSpec((1, tn), lambda i, j, k: (0, j)),
            ],
            out_specs=pl.BlockSpec((tm, tn), lambda i, j, k: (i, j)),
            scratch_shapes=[pltpu.VMEM((tm, tn), jnp.float32)],
        ),
        compiler_params=pltpu.CompilerParams(
            dimension_semantics=("parallel", "parallel", "arbitrary"),
            vmem_limit_bytes=_VMEM_LIMIT,
        ),
    )(x2d, w_t, b2d)


# ------------------------ flash-style attention kernel -----------------------

def _attn_kernel(*refs, num_heads, d_k, has_mask, mxu_dtype):
    if has_mask:
        q_ref, k_ref, v_ref, mask_ref, o_ref, m_ref, l_ref, acc_ref, qh_ref = refs
    else:
        q_ref, k_ref, v_ref, o_ref, m_ref, l_ref, acc_ref, qh_ref = refs
        mask_ref = None

    ki = pl.program_id(2)
    tq = q_ref.shape[1]
    tkv = k_ref.shape[1]

    @pl.when(ki == 0)
    def _():
        m_ref[...] = jnp.full_like(m_ref, -jnp.inf)
        l_ref[...] = jnp.zeros_like(l_ref)
        acc_ref[...] = jnp.zeros_like(acc_ref)
        # Query tile is resident across the kv axis: split heads once and stash it.
        # (1/sqrt(d_k) is already folded into the query projection weights.)
        q = q_ref[0].astype(mxu_dtype)                           # (tq, h*d_k)
        qh_ref[...] = jnp.swapaxes(q.reshape(tq, num_heads, d_k), 0, 1)

    # Head-batched K / V tiles for this kv step: (h, tkv, d_k).
    kh = jnp.swapaxes(k_ref[0].astype(mxu_dtype).reshape(tkv, num_heads, d_k), 0, 1)
    vh = jnp.swapaxes(v_ref[0].astype(mxu_dtype).reshape(tkv, num_heads, d_k), 0, 1)

    # All heads in one batched MXU call: (h, tq, tkv) scores, f32 accumulation.
    s = jnp.einsum("hqd,hkd->hqk", qh_ref[...], kh,
                   preferred_element_type=jnp.float32)

    if has_mask:
        is_masked = mask_ref[0] == 0                             # (tq, tkv), int8 cmp
        s = jnp.where(is_masked[None, :, :], jnp.float32(-1000000000.0), s)

    # Batched online-softmax update.
    m_prev = m_ref[...]                                          # (h, tq, 1)
    m_new = jnp.maximum(m_prev, jnp.max(s, axis=-1, keepdims=True))
    alpha = jnp.exp(m_prev - m_new)
    p = jnp.exp(s - m_new)                                       # (h, tq, tkv)
    l_ref[...] = alpha * l_ref[...] + jnp.sum(p, axis=-1, keepdims=True)
    acc_ref[...] = alpha * acc_ref[...] + jnp.einsum(
        "hqk,hkd->hqd", p.astype(mxu_dtype), vh,
        preferred_element_type=jnp.float32)
    m_ref[...] = m_new

    @pl.when(ki == pl.num_programs(2) - 1)
    def _():
        out = acc_ref[...] / l_ref[...]          # exact reciprocal (once per tile)
        # (h, tq, d_k) -> (tq, h*d_k): one lane-dense full-width store.
        out = jnp.swapaxes(out, 0, 1).reshape(tq, num_heads * d_k)
        o_ref[0] = out.astype(o_ref.dtype)


def attention_heads(q, k, v, mask, *, num_heads, d_model,
                    q_col=0, k_col=0, v_col=0, mxu_dtype=jnp.bfloat16):
    """Attention over head-concatenated activations.

    q: (B, Sq, Wq) where the query projection lives in columns
       [q_col*d_model, (q_col+1)*d_model); similarly for k, v (enables the
       zero-copy fused-QKV path where q is k is v with Wq = 3*d_model).
    mask: None or (B, Sq, Skv) int8 (0 = masked out).
    Returns (B, Sq, d_model) in mxu_dtype, heads concatenated along the last axis.
    """
    B, Sq, _ = q.shape
    _, Skv, _ = k.shape
    d_k = d_model // num_heads

    itemsize = jnp.dtype(q.dtype).itemsize
    kv_resident = 2 * Skv * d_model * itemsize <= _KV_RESIDENT_BUDGET
    if kv_resident:
        tkv = Skv                       # kv axis collapses: K/V loaded once per (b, qi)
        tq = _pick_tile(Sq, (256, 128))
    else:
        tkv = _pick_tile(Skv, (256, 128))
        # Streaming KV: larger tq amortizes repeated K/V passes (v7x-friendly).
        tq = _pick_tile(Sq, (512, 256, 128))
    grid = (B, Sq // tq, Skv // tkv)

    q_spec = pl.BlockSpec((1, tq, d_model), lambda b, qi, ki, c=q_col: (b, qi, c))
    k_spec = pl.BlockSpec((1, tkv, d_model), lambda b, qi, ki, c=k_col: (b, ki, c))
    v_spec = pl.BlockSpec((1, tkv, d_model), lambda b, qi, ki, c=v_col: (b, ki, c))
    out_spec = pl.BlockSpec((1, tq, d_model), lambda b, qi, ki: (b, qi, 0))

    in_specs = [q_spec, k_spec, v_spec]
    inputs = [q, k, v]
    has_mask = mask is not None
    if has_mask:
        in_specs.append(pl.BlockSpec((1, tq, tkv), lambda b, qi, ki: (b, qi, ki)))
        inputs.append(mask)

    kern = functools.partial(
        _attn_kernel, num_heads=num_heads, d_k=d_k,
        has_mask=has_mask, mxu_dtype=mxu_dtype)

    return pl.pallas_call(
        kern,
        out_shape=jax.ShapeDtypeStruct((B, Sq, d_model), mxu_dtype),
        grid_spec=pltpu.PrefetchScalarGridSpec(
            num_scalar_prefetch=0,
            grid=grid,
            in_specs=in_specs,
            out_specs=out_spec,
            scratch_shapes=[
                pltpu.VMEM((num_heads, tq, 1), jnp.float32),     # running row max
                pltpu.VMEM((num_heads, tq, 1), jnp.float32),     # running denominator
                pltpu.VMEM((num_heads, tq, d_k), jnp.float32),   # output accumulator
                pltpu.VMEM((num_heads, tq, d_k), mxu_dtype),     # head-split query tile
            ],
        ),
        compiler_params=pltpu.CompilerParams(
            dimension_semantics=("parallel", "parallel", "arbitrary"),
            vmem_limit_bytes=_VMEM_LIMIT,
        ),
    )(*inputs)


# ----------------------------- module wrapper ---------------------------------

def init_params(key, d_model):
    """Four Linear(d_model, d_model) layers, PyTorch layout: W (out, in), b (out,)."""
    bound = 1.0 / math.sqrt(d_model)
    params = []
    for i in range(4):
        kw, kb = jax.random.split(jax.random.fold_in(key, i))
        W = jax.random.uniform(kw, (d_model, d_model), jnp.float32, -bound, bound)
        b = jax.random.uniform(kb, (d_model,), jnp.float32, -bound, bound)
        params.append((W, b))
    return params


def prepare_params(params, h, *, mxu_dtype=jnp.bfloat16):
    """One-time prep: fold 1/sqrt(d_k) into the Q projection, pre-transpose and
    pre-cast weights to the MXU dtype, build the fused QKV operand."""
    (Wq, bq), (Wk, bk), (Wv, bv), (Wo, bo) = params
    d_model = Wq.shape[0]
    d_k = d_model // h
    scale = 1.0 / math.sqrt(d_k)
    Wq_s, bq_s = Wq * scale, bq * scale        # exact: (q/sqrt(dk)) . k == q.k/sqrt(dk)

    def cast(w):
        return w.astype(mxu_dtype)

    return {
        "mxu_dtype": mxu_dtype,
        "wq_t": cast(Wq_s.T), "bq": bq_s.astype(jnp.float32),
        "wk_t": cast(Wk.T), "bk": bk.astype(jnp.float32),
        "wv_t": cast(Wv.T), "bv": bv.astype(jnp.float32),
        "wo_t": cast(Wo.T), "bo": bo.astype(jnp.float32),
        "w_qkv_t": cast(jnp.concatenate([Wq_s.T, Wk.T, Wv.T], axis=1)),
        "b_qkv": jnp.concatenate([bq_s, bk, bv], axis=0).astype(jnp.float32),
    }


def multi_headed_attention(prepped, h, query, key, value, mask=None):
    """Mirrors MultiHeadedAttention.forward (eval mode). Inputs: (B, S, d_model)."""
    B, Sq, d_model = query.shape
    _, Skv, _ = key.shape
    mxu = prepped["mxu_dtype"]

    mask3 = None
    if mask is not None:
        # int8 mask: 4x less HBM/VMEM traffic than int32, exact masked_fill semantics.
        mask3 = jnp.broadcast_to(mask, (B, Sq, Skv)).astype(jnp.int8)

    if (query is key) and (key is value):
        # Self-attention: fused QKV projection (one pass over x, one launch).
        qkv = linear(query.reshape(B * Sq, d_model), prepped["w_qkv_t"],
                     prepped["b_qkv"], out_dtype=mxu)
        qkv = qkv.reshape(B, Sq, 3 * d_model)
        if d_model % 128 == 0:
            # Zero-copy: BlockSpec picks the q/k/v column panels out of qkv.
            x = attention_heads(qkv, qkv, qkv, mask3, num_heads=h, d_model=d_model,
                                q_col=0, k_col=1, v_col=2, mxu_dtype=mxu)
        else:
            q3 = qkv[:, :, 0 * d_model:1 * d_model]
            k3 = qkv[:, :, 1 * d_model:2 * d_model]
            v3 = qkv[:, :, 2 * d_model:3 * d_model]
            x = attention_heads(q3, k3, v3, mask3, num_heads=h, d_model=d_model,
                                mxu_dtype=mxu)
    else:
        q3 = linear(query.reshape(B * Sq, d_model), prepped["wq_t"], prepped["bq"],
                    out_dtype=mxu).reshape(B, Sq, d_model)
        k3 = linear(key.reshape(B * Skv, d_model), prepped["wk_t"], prepped["bk"],
                    out_dtype=mxu).reshape(B, Skv, d_model)
        v3 = linear(value.reshape(B * Skv, d_model), prepped["wv_t"], prepped["bv"],
                    out_dtype=mxu).reshape(B, Skv, d_model)
        x = attention_heads(q3, k3, v3, mask3, num_heads=h, d_model=d_model,
                            mxu_dtype=mxu)

    # x is already in head-concatenated (B, Sq, h*d_k) layout -> no transpose needed.
    out = linear(x.reshape(B * Sq, d_model), prepped["wo_t"], prepped["bo"],
                 out_dtype=jnp.float32)
    return out.reshape(B, Sq, d_model)


# -------------------------------- reference -----------------------------------

def reference(params, h, query, key, value, mask=None):
    B, Sq, d_model = query.shape
    _, Skv, _ = key.shape
    d_k = d_model // h

    def lin(layer, x):
        W, b = layer
        return x @ W.T + b

    def split(x, S):
        return x.reshape(B, S, h, d_k).transpose(0, 2, 1, 3)

    q = split(lin(params[0], query), Sq)
    k = split(lin(params[1], key), Skv)
    v = split(lin(params[2], value), Skv)
    scores = jnp.einsum("bhqd,bhkd->bhqk", q, k) / math.sqrt(d_k)
    if mask is not None:
        scores = jnp.where(mask[:, None, :, :] == 0, -1000000000.0, scores)
    p = jax.nn.softmax(scores, axis=-1)
    x = jnp.einsum("bhqk,bhkd->bhqd", p, v)
    x = x.transpose(0, 2, 1, 3).reshape(B, Sq, d_model)
    return lin(params[3], x)


# ----------------------------------- main ---------------------------------------

if __name__ == "__main__":
    B, S, d_model, h = 2, 8, 128, 4

    root = jax.random.PRNGKey(0)
    kx, kq, kk, kv, kp = jax.random.split(root, 5)
    params = init_params(kp, d_model)
    prepped = prepare_params(params, h)        # bf16 MXU inputs, f32 accumulation

    # bf16 MXU inputs vs the exact f32 reference: loosened tolerance.
    TOL = 3e-2

    # --- 1) self-attention, no mask: fused-QKV + zero-copy column-panel path ---
    x_in = jax.random.normal(kx, (B, S, d_model), jnp.float32)
    out1 = multi_headed_attention(prepped, h, x_in, x_in, x_in, mask=None)
    out1 = jax.block_until_ready(out1)
    ref1 = reference(params, h, x_in, x_in, x_in, mask=None)
    assert out1.shape == (B, S, d_model)
    err1 = float(jnp.max(jnp.abs(out1 - ref1)))
    assert jnp.allclose(out1, ref1, atol=TOL, rtol=TOL), f"self-attn max err {err1}"

    # --- 2) cross-attention with a causal mask: separate-projection path ---
    query = jax.random.normal(kq, (B, S, d_model), jnp.float32)
    key_in = jax.random.normal(kk, (B, S, d_model), jnp.float32)
    value = jax.random.normal(kv, (B, S, d_model), jnp.float32)
    mask = jnp.broadcast_to(jnp.tril(jnp.ones((S, S), jnp.int32)), (B, S, S))
    out2 = multi_headed_attention(prepped, h, query, key_in, value, mask=mask)
    out2 = jax.block_until_ready(out2)
    ref2 = reference(params, h, query, key_in, value, mask=mask)
    err2 = float(jnp.max(jnp.abs(out2 - ref2)))
    assert jnp.allclose(out2, ref2, atol=TOL, rtol=TOL), f"masked attn max err {err2}"

    print("KERNEL_OK")
</pallas_src>

<mosaic_0001>
module attributes {stable_mosaic.version = 11 : i64} {
  func.func @_linear_kernel(%arg0: i32, %arg1: i32, %arg2: i32, %arg3: memref<16x128xf32, #tpu.memory_space<vmem>>, %arg4: memref<128x128xbf16, #tpu.memory_space<vmem>>, %arg5: memref<1x128xf32, #tpu.memory_space<vmem>>, %arg6: memref<16x128xbf16, #tpu.memory_space<vmem>>, %arg7: memref<16x128xf32, #tpu.memory_space<vmem>>) attributes {dimension_semantics = [#tpu.dimension_semantics<parallel>, #tpu.dimension_semantics<parallel>, #tpu.dimension_semantics<arbitrary>], iteration_bounds = array<i64: 1, 3, 1>, scalar_prefetch = 0 : i64, scratch_operands = 1 : i64, tpu.core_type = #tpu.core_type<tc>, window_params = [{transform_indices = @transform_0, window_bounds = array<i64: 16, 128>}, {transform_indices = @transform_1, window_bounds = array<i64: 128, 128>}, {transform_indices = @transform_2, window_bounds = array<i64: 1, 128>}, {transform_indices = @transform_3, window_bounds = array<i64: 16, 128>}]} {
    %c0_i32 = arith.constant 0 : i32
    %0 = arith.cmpi eq, %arg2, %c0_i32 : i32
    %1 = arith.extui %0 : i1 to i32
    %c0_i32_0 = arith.constant 0 : i32
    %2 = arith.cmpi ne, %1, %c0_i32_0 : i32
    scf.if %2 {
      %cst_10 = arith.constant 0.000000e+00 : f32
      %13 = vector.broadcast %cst_10 : f32 to vector<16x128xf32>
      %c0_11 = arith.constant 0 : index
      %c0_12 = arith.constant 0 : index
      %14 = vector.load %arg7[%c0_11, %c0_12] : memref<16x128xf32, #tpu.memory_space<vmem>>, vector<16x128xf32>
      tpu.vector_store %arg7[%c0_11, %c0_12], %13 {strides = array<i32>} : memref<16x128xf32, #tpu.memory_space<vmem>>, vector<16x128xf32>,
    } else {
    }
    %c0 = arith.constant 0 : index
    %c0_1 = arith.constant 0 : index
    %3 = vector.load %arg7[%c0, %c0_1] : memref<16x128xf32, #tpu.memory_space<vmem>>, vector<16x128xf32>
    %c0_2 = arith.constant 0 : index
    %c0_3 = arith.constant 0 : index
    %4 = vector.load %arg3[%c0_2, %c0_3] : memref<16x128xf32, #tpu.memory_space<vmem>>, vector<16x128xf32>
    %5 = arith.truncf %4 : vector<16x128xf32> to vector<16x128xbf16>
    %c0_4 = arith.constant 0 : index
    %c0_5 = arith.constant 0 : index
    %6 = vector.load %arg4[%c0_4, %c0_5] : memref<128x128xbf16, #tpu.memory_space<vmem>>, vector<128x128xbf16>
    %cst = arith.constant dense<0.000000e+00> : vector<16x128xf32>
    %7 = tpu.matmul %5, %6, %cst {dimension_numbers = #tpu.dot_dimension_numbers<[1], [0], [0], [1], [0, 0, 1, 1], [], []>} : vector<16x128xbf16>, vector<128x128xbf16>, vector<16x128xf32> -> vector<16x128xf32>
    %8 = arith.addf %3, %7 : vector<16x128xf32>
    %c0_6 = arith.constant 0 : index
    %c0_7 = arith.constant 0 : index
    %9 = vector.load %arg7[%c0_6, %c0_7] : memref<16x128xf32, #tpu.memory_space<vmem>>, vector<16x128xf32>
    tpu.vector_store %arg7[%c0_6, %c0_7], %8 {strides = array<i32>} : memref<16x128xf32, #tpu.memory_space<vmem>>, vector<16x128xf32>,
    %c0_i32_8 = arith.constant 0 : i32
    %10 = arith.cmpi eq, %arg2, %c0_i32_8 : i32
    %11 = arith.extui %10 : i1 to i32
    %c0_i32_9 = arith.constant 0 : i32
    %12 = arith.cmpi ne, %11, %c0_i32_9 : i32
    scf.if %12 {
      %c0_10 = arith.constant 0 : index
      %c0_11 = arith.constant 0 : index
      %13 = vector.load %arg7[%c0_10, %c0_11] : memref<16x128xf32, #tpu.memory_space<vmem>>, vector<16x128xf32>
      %c0_12 = arith.constant 0 : index
      %c0_13 = arith.constant 0 : index
      %14 = vector.load %arg5[%c0_12, %c0_13] : memref<1x128xf32, #tpu.memory_space<vmem>>, vector<1x128xf32>
      %15 = vector.broadcast %14 : vector<1x128xf32> to vector<16x128xf32>
      %16 = arith.addf %13, %15 : vector<16x128xf32>
      %17 = arith.truncf %16 : vector<16x128xf32> to vector<16x128xbf16>
      %c0_14 = arith.constant 0 : index
      %c0_15 = arith.constant 0 : index
      %18 = vector.load %arg6[%c0_14, %c0_15] : memref<16x128xbf16, #tpu.memory_space<vmem>>, vector<16x128xbf16>
      tpu.vector_store %arg6[%c0_14, %c0_15], %17 {strides = array<i32>} : memref<16x128xbf16, #tpu.memory_space<vmem>>, vector<16x128xbf16>,
    } else {
    }
    return
  }
  func.func @transform_0(%arg0: i32, %arg1: i32, %arg2: i32) -> (i32, i32) {
    %c0_i32 = arith.constant 0 : i32
    return %arg0, %arg2 : i32, i32
  }
  func.func @transform_1(%arg0: i32, %arg1: i32, %arg2: i32) -> (i32, i32) {
    %c0_i32 = arith.constant 0 : i32
    return %arg2, %arg1 : i32, i32
  }
  func.func @transform_2(%arg0: i32, %arg1: i32, %arg2: i32) -> (i32, i32) {
    %c0_i32 = arith.constant 0 : i32
    %c0_i32_0 = arith.constant 0 : i32
    return %c0_i32, %arg1 : i32, i32
  }
  func.func @transform_3(%arg0: i32, %arg1: i32, %arg2: i32) -> (i32, i32) {
    %c0_i32 = arith.constant 0 : i32
    return %arg0, %arg1 : i32, i32
  }
}

</mosaic_0001>

<llo_original>
// kernel: tpu_custom_call.1
$region0: #{tpu_custom_call.1}
  #allocation0 [shape = 'u32[]', space=smem, size = 0x4, offset = 0x4, fixed_abs, tag = 'smem constant byte address 0x4 - core index']
  #allocation1 [shape = 'u32[144,128]{1,0:T(1,128)}', space=vmem, size = 0x12000, scoped, tag = 'internal scratch']
  #allocation2 [shape = 'f32[16,128]{1,0:T(8,128)}', space=vmem, size = 0x2000, scoped, tag = 'scratch operand']
  %s0 = inlined_call_operand.hbm [shape: f32[16,128], index: 0, kind: input, shape index: {}]
  %s1 = inlined_call_operand.hbm [shape: bf16[128,384], index: 1, kind: input, shape index: {}]
  %s2 = inlined_call_operand.vmem [shape: f32[1,384], index: 2, kind: input, shape index: {}]
  %s3 = inlined_call_operand.hbm [shape: bf16[16,384], index: 3, kind: output, shape index: {}]
  %s4 = sld [smem:[#allocation0]]
  $region61: #{tpu_custom_call.1} parent=0
    _
  %s6 = ssub.s32 1, %s4
  %s7 = scalar_select 0, %s6, %s4
  $region1: #{tpu_custom_call.1} parent=0
    #allocation3 [shape = 'u8[8192]{0}', space=vmem, size = 0x2000, scoped, tag = 'input window, operand 0, single buffered']
    #allocation4 [shape = 's32[2]{0}', space=sflag, size = 0x8, scoped, tag = 'scoped memory for tpu_custom_call.1']
    #allocation5 [shape = 's32[2]{0}', space=sflag, size = 0x8, scoped, tag = 'scoped memory for tpu_custom_call.1']
    #allocation6 [shape = 'u8[65536]{0}', space=vmem, size = 0x10000, scoped, tag = 'input window, operand 1']
    #allocation7 [shape = 's32[2]{0}', space=sflag, size = 0x8, scoped, tag = 'scoped memory for tpu_custom_call.1']
    #allocation8 [shape = 'u8[8192]{0}', space=vmem, size = 0x2000, scoped, tag = 'output window, operand 0']
    %8 = vsyncpa [#allocation4], 0
    %9 = vsyncpa [#allocation7], 0
    %s10 = scalar_lea.sflag [#allocation7], 1
    %11 = vsyncpa %s10, 0
    %12 = vsyncpa [#allocation5], 0
    %s13 = scalar_lea.sflag [#allocation5], 1
    %14 = vsyncpa %s13, 0
    loop: start=0, step=1, limit=5
    $region2: #{tpu_custom_call.1} parent=1 // loop_pre_header
      _
    $region3: #{tpu_custom_call.1} parent=1 // loop_header
      %s16 = sphi 0, %s20
      %p17 = scmp.ge.s32.totalorder %s16, 5
      %s23 = sphi 0, %s42
      %s24 = sphi 0, %s38
      %s25 = sphi 0, %s34
      %s26 = sphi 0, %s23
      %s27 = sphi 0, %s24
      %s28 = sphi 0, %s25
      %s29 = sphi 0, %s26
      %s30 = sphi 0, %s27
      %s31 = sphi 0, %s28
      %s47 = sphi 0, %s49
      %s50 = sphi 0, %s47
      %s51 = sphi 0, %s50
      %s67 = sphi 0, %s51
      %s75 = sphi 0, %s77
      %s78 = sphi 0, %s75
      %s79 = sphi 0, %s78
      %s95 = sphi 0, %s79
      %s101 = sphi 0, %s103
      %s104 = sphi 0, %s101
      %s105 = sphi 0, %s104
      %s121 = sphi 0, %s105
      %s129 = sphi 0, %s131
      %s132 = sphi 0, %s129
      %s133 = sphi 0, %s132
      %s149 = sphi 0, %s133
    $region4: #{tpu_custom_call.1} parent=1 // loop_header_branch
      %19 = sbr.rel (%p17) target = $region8
    $region5: #{tpu_custom_call.1} parent=1 // loop_body
      %s21 = ssub.s32 %s16, 1
      %s22 = ssub.s32 %s16, 2
      %s32 = sadd.s32 1, %s25
      %p33 = scmp.ge.s32.totalorder %s32, 1
      %s34 = scalar_select %p33, 0, %s32
      %s35 = sadd.s32 1, %s24
      %s36 = scalar_select %p33, %s35, %s24
      %p37 = scmp.ge.s32.totalorder %s36, 3
      %s38 = scalar_select %p37, 0, %s36
      %s39 = sadd.s32 1, %s23
      %s40 = scalar_select %p37, %s39, %s23
      %p41 = scmp.ge.s32.totalorder %s40, 1
      %s42 = scalar_select %p41, 0, %s40
      %s43 = ssub.s32 %s23, %s42
      %s44 = ssub.s32 %s25, %s34
      %s45 = sor.u32 %s43, %s44
      %p46 = scmp.eq.s32.totalorder %s45, 0
      %s48 = sadd.s32 %s47, 1
      %s49 = scalar_select %p46, %s47, %s48
      %p52 = pneg %p46
      %p53 = scmp.eq.s32.totalorder %s16, 2
      %p54 = por %p52, %p53
      %p55 = scmp.ne.s32.totalorder %s47, %s50
      %p56 = scmp.eq.s32.totalorder %s16, 0
      %p57 = por %p55, %p56
      %p58 = scmp.ne.s32.totalorder %s47, %s50
      %p59 = scmp.eq.s32.totalorder %s21, 2
      %p60 = por %p58, %p59
      %p61 = scmp.ne.s32.totalorder %s50, %s51
      %p62 = scmp.eq.s32.totalorder %s21, 0
      %p63 = por %p61, %p62
      %p64 = scmp.ne.s32.totalorder %s50, %s51
      %p65 = scmp.eq.s32.totalorder %s22, 2
      %p66 = por %p64, %p65
      %p68 = scmp.ne.s32.totalorder %s51, %s67
      %p69 = scmp.eq.s32.totalorder %s22, 0
      %p70 = por %p68, %p69
      %s71 = ssub.s32 %s25, %s34
      %s72 = ssub.s32 %s24, %s38
      %s73 = sor.u32 %s71, %s72
      %p74 = scmp.eq.s32.totalorder %s73, 0
      %s76 = sadd.s32 %s75, 1
      %s77 = scalar_select %p74, %s75, %s76
      %p80 = pneg %p74
      %p81 = scmp.eq.s32.totalorder %s16, 2
      %p82 = por %p80, %p81
      %p83 = scmp.ne.s32.totalorder %s75, %s78
      %p84 = scmp.eq.s32.totalorder %s16, 0
      %p85 = por %p83, %p84
      %p86 = scmp.ne.s32.totalorder %s75, %s78
      %p87 = scmp.eq.s32.totalorder %s21, 2
      %p88 = por %p86, %p87
      %p89 = scmp.ne.s32.totalorder %s78, %s79
      %p90 = scmp.eq.s32.totalorder %s21, 0
      %p91 = por %p89, %p90
      %p92 = scmp.ne.s32.totalorder %s78, %s79
      %p93 = scmp.eq.s32.totalorder %s22, 2
      %p94 = por %p92, %p93
      %p96 = scmp.ne.s32.totalorder %s79, %s95
      %p97 = scmp.eq.s32.totalorder %s22, 0
      %p98 = por %p96, %p97
      %s99 = ssub.s32 %s24, %s38
      %p100 = scmp.eq.s32.totalorder %s99, 0
      %s102 = sadd.s32 %s101, 1
      %s103 = scalar_select %p100, %s101, %s102
      %p106 = pneg %p100
      %p107 = scmp.eq.s32.totalorder %s16, 2
      %p108 = por %p106, %p107
      %p109 = scmp.ne.s32.totalorder %s101, %s104
      %p110 = scmp.eq.s32.totalorder %s16, 0
      %p111 = por %p109, %p110
      %p112 = scmp.ne.s32.totalorder %s101, %s104
      %p113 = scmp.eq.s32.totalorder %s21, 2
      %p114 = por %p112, %p113
      %p115 = scmp.ne.s32.totalorder %s104, %s105
      %p116 = scmp.eq.s32.totalorder %s21, 0
      %p117 = por %p115, %p116
      %p118 = scmp.ne.s32.totalorder %s104, %s105
      %p119 = scmp.eq.s32.totalorder %s22, 2
      %p120 = por %p118, %p119
      %p122 = scmp.ne.s32.totalorder %s105, %s121
      %p123 = scmp.eq.s32.totalorder %s22, 0
      %p124 = por %p122, %p123
      %s125 = ssub.s32 %s23, %s42
      %s126 = ssub.s32 %s24, %s38
      %s127 = sor.u32 %s125, %s126
      %p128 = scmp.eq.s32.totalorder %s127, 0
      %s130 = sadd.s32 %s129, 1
      %s131 = scalar_select %p128, %s129, %s130
      %p134 = pneg %p128
      %p135 = scmp.eq.s32.totalorder %s16, 2
      %p136 = por %p134, %p135
      %p137 = scmp.ne.s32.totalorder %s129, %s132
      %p138 = scmp.eq.s32.totalorder %s16, 0
      %p139 = por %p137, %p138
      %p140 = scmp.ne.s32.totalorder %s129, %s132
      %p141 = scmp.eq.s32.totalorder %s21, 2
      %p142 = por %p140, %p141
      %p143 = scmp.ne.s32.totalorder %s132, %s133
      %p144 = scmp.eq.s32.totalorder %s21, 0
      %p145 = por %p143, %p144
      %p146 = scmp.ne.s32.totalorder %s132, %s133
      %p147 = scmp.eq.s32.totalorder %s22, 2
      %p148 = por %p146, %p147
      %p150 = scmp.ne.s32.totalorder %s133, %s149
      %p151 = scmp.eq.s32.totalorder %s22, 0
      %p152 = por %p150, %p151
      %p153 = scmp.le.s32.totalorder 1, %s16
      %p154 = scmp.lt.s32.totalorder %s16, 4
      %p155 = pnand %p153, %p154
      %p156 = pneg %p155
      // Predicated region
      $region9: #{tpu_custom_call.1} parent=5 // pred_check
        _
      $region10: #{tpu_custom_call.1} parent=5 // pred_check_branch
        %158 = sbr.rel (%p155) target = $region12
      $region11: #{tpu_custom_call.1} parent=5 // pred_region
        %s159 = ssub.s32 %s16, 1
        // Predicated region
        $region13: #{tpu_custom_call.1} parent=11 // pred_check
          %p160 = pneg %p63
        $region14: #{tpu_custom_call.1} parent=11 // pred_check_branch
          %162 = sbr.rel (%p160) target = $region16
        $region15: #{tpu_custom_call.1} parent=11 // pred_region
          %s163 = smul.u32 2, %s26
          %s165 = ssub.s32 256, 256
          %166 = vsyncadd [#allocation4], %s165
          %s167 = sadd.s32 %s28, %s163
          %s168 = smul.addr %s167, 128
          %s169 = scalar_lea.hbm %s0, %s168
          %s170 = sshll.u32 [#allocation3], 4
          %s171 = int_to_ptr.vmem [resolvable:$true] %s170
          %176 = dma.hbm_to_vmem [thread:$0]  %s169, 256, %s171, [#allocation4], 128, 128, 8
        $region16: #{tpu_custom_call.1} parent=11 // pred_fallthru
          _
      $region12: #{tpu_custom_call.1} parent=5 // pred_fallthru
        _
      %p177 = scmp.lt.s32.totalorder %s16, 3
      // Predicated region
      $region17: #{tpu_custom_call.1} parent=5 // pred_check
        %p178 = pneg %p177
      $region18: #{tpu_custom_call.1} parent=5 // pred_check_branch
        %180 = sbr.rel (%p178) target = $region20
      $region19: #{tpu_custom_call.1} parent=5 // pred_region
        // Predicated region
        $region21: #{tpu_custom_call.1} parent=19 // pred_check
          %p181 = pneg %p85
        $region22: #{tpu_custom_call.1} parent=19 // pred_check_branch
          %183 = sbr.rel (%p181) target = $region24
        $region23: #{tpu_custom_call.1} parent=19 // pred_region
          %s184 = sand.u32 %s75, 1
          %s185 = scalar_lea.sflag [#allocation7], %s184
          %s186 = sand.u32 %s75, 1
          %s187 = smul.addr %s186, 64
          %s188 = scalar_lea.vmem [#allocation6], %s187
          %s189 = smul.u32 16, %s25
          %s191 = ssub.s32 1024, 1024
          %192 = vsyncadd %s185, %s191
          %s193 = smul.addr %s189, 3
          %s194 = sadd.s32 %s24, %s193
          %s195 = smul.addr %s194, 64
          %s196 = scalar_lea.hbm %s1, %s195
          %s197 = sshll.u32 %s188, 4
          %s198 = int_to_ptr.vmem [resolvable:$true] %s197
          %203 = dma.hbm_to_vmem [thread:$0]  %s196, 1024, %s198, %s185, 192, 64, 4
        $region24: #{tpu_custom_call.1} parent=19 // pred_fallthru
          _
        // Predicated region
        $region25: #{tpu_custom_call.1} parent=19 // pred_check
          %p204 = pneg %p111
        $region26: #{tpu_custom_call.1} parent=19 // pred_check_branch
          %206 = sbr.rel (%p204) target = $region28
        $region27: #{tpu_custom_call.1} parent=19 // pred_region
          %p207 = scmp.lt.s32.totalorder %s24, 2
          %s208 = scalar_select %p207, %s24, 2
          %s209 = scalar_lea.vmem %s2, %s208
        $region28: #{tpu_custom_call.1} parent=19 // pred_fallthru
          _
      $region20: #{tpu_custom_call.1} parent=5 // pred_fallthru
        _
      %p210 = scmp.le.s32.totalorder 1, %s16
      %p211 = scmp.lt.s32.totalorder %s16, 4
      %p212 = pnand %p210, %p211
      %p213 = pneg %p212
      // Predicated region
      $region29: #{tpu_custom_call.1} parent=5 // pred_check
        _
      $region30: #{tpu_custom_call.1} parent=5 // pred_check_branch
        %215 = sbr.rel (%p212) target = $region32
      $region31: #{tpu_custom_call.1} parent=5 // pred_region
        %s216 = ssub.s32 %s16, 1
        // Predicated region
        $region33: #{tpu_custom_call.1} parent=31 // pred_check
          %p217 = pneg %p63
        $region34: #{tpu_custom_call.1} parent=31 // pred_check_branch
          %219 = sbr.rel (%p217) target = $region36
        $region35: #{tpu_custom_call.1} parent=31 // pred_region
          %220 = dma.done [#allocation4], 256
        $region36: #{tpu_custom_call.1} parent=31 // pred_fallthru
          _
        %s221 = sand.u32 %s78, 1
        %s222 = scalar_lea.sflag [#allocation7], %s221
        %s223 = sand.u32 %s78, 1
        %s224 = smul.addr %s223, 64
        %s225 = scalar_lea.vmem [#allocation6], %s224
        // Predicated region
        $region37: #{tpu_custom_call.1} parent=31 // pred_check
          %p226 = pneg %p91
        $region38: #{tpu_custom_call.1} parent=31 // pred_check_branch
          %228 = sbr.rel (%p226) target = $region40
        $region39: #{tpu_custom_call.1} parent=31 // pred_region
          %229 = dma.done %s222, 1024
        $region40: #{tpu_custom_call.1} parent=31 // pred_fallthru
          _
        %p230 = pneg %p63
        %p231 = pneg %p60
        %s232 = sand.u32 %s78, 1
        %s233 = scalar_lea.sflag [#allocation7], %s232
        %s234 = sand.u32 %s78, 1
        %s235 = smul.addr %s234, 64
        %s236 = scalar_lea.vmem [#allocation6], %s235
        %p237 = pneg %p91
        %p238 = pneg %p88
        %p239 = scmp.lt.s32.totalorder %s27, 2
        %s240 = scalar_select %p239, %s27, 2
        %s241 = scalar_lea.vmem %s2, %s240
        %p242 = pneg %p117
        %p243 = pneg %p114
        %p244 = pneg %p145
        %p245 = pneg %p142
        %s246 = sand.u32 %s132, 1
        %s247 = scalar_lea.sflag [#allocation5], %s246
        %s248 = sand.u32 %s132, 1
        %s249 = smul.addr %s248, 8
        %s250 = scalar_lea.vmem [#allocation8], %s249
        %s251 = smul.u32 2, %s26
        %s252 = smul.u32 16, %s28
        %p253 = scmp.lt.s32.totalorder %s27, 2
        %s254 = scalar_select %p253, %s27, 2
        %s255 = scalar_lea.vmem %s2, %s254
        %s256 = smul.u32 2, %s26
        %p258 = scmp.eq.s32.totalorder %s28, 0
        // Predicated region
        $region41: #{tpu_custom_call.1} parent=31 // pred_check
          %p259 = pneg %p258
        $region42: #{tpu_custom_call.1} parent=31 // pred_check_branch
          %261 = sbr.rel (%p259) target = $region44
        $region43: #{tpu_custom_call.1} parent=31 // pred_region
          %262 = vst [vmem:[#allocation2] sm:$0xff] 0.0
          %263 = vst [vmem:[#allocation2 + $0x8] sm:$0xff] 0.0
        $region44: #{tpu_custom_call.1} parent=31 // pred_fallthru
          _
        %v264 = vld [vmem:[#allocation2] sm:$0xff]
        %v265 = vld [vmem:[#allocation2 + $0x8] sm:$0xff]
        %v266 = vld [vmem:[#allocation3] sm:$0xff]
        %v267 = vld [vmem:[#allocation3 + $0x8] sm:$0xff]
        %v268 = vpack.c.bf16 %v267, %v266
        %v269 = vld [vmem:[%s225] sm:$0xf]
        %v270 = vld [vmem:[%s225 + $0x4] sm:$0xf]
        %v271 = vld [vmem:[%s225 + $0x8] sm:$0xf]
        %v272 = vld [vmem:[%s225 + $0xc] sm:$0xf]
        %v273 = vld [vmem:[%s225 + $0x10] sm:$0xf]
        %v274 = vld [vmem:[%s225 + $0x14] sm:$0xf]
        %v275 = vld [vmem:[%s225 + $0x18] sm:$0xf]
        %v276 = vld [vmem:[%s225 + $0x1c] sm:$0xf]
        %v277 = vld [vmem:[%s225 + $0x20] sm:$0xf]
        %v278 = vld [vmem:[%s225 + $0x24] sm:$0xf]
        %v279 = vld [vmem:[%s225 + $0x28] sm:$0xf]
        %v280 = vld [vmem:[%s225 + $0x2c] sm:$0xf]
        %v281 = vld [vmem:[%s225 + $0x30] sm:$0xf]
        %v282 = vld [vmem:[%s225 + $0x34] sm:$0xf]
        %v283 = vld [vmem:[%s225 + $0x38] sm:$0xf]
        %v284 = vld [vmem:[%s225 + $0x3c] sm:$0xf]
        %v301 = vunpack.c.l.b16 %v269
        %v302 = vunpack.c.l.b16 %v270
        %v303 = vunpack.c.l.b16 %v271
        %v304 = vunpack.c.l.b16 %v272
        %v305 = vunpack.c.l.b16 %v273
        %v306 = vunpack.c.l.b16 %v274
        %v307 = vunpack.c.l.b16 %v275
        %v308 = vunpack.c.l.b16 %v276
        %v309 = vunpack.c.l.b16 %v277
        %v310 = vunpack.c.l.b16 %v278
        %v311 = vunpack.c.l.b16 %v279
        %v312 = vunpack.c.l.b16 %v280
        %v313 = vunpack.c.l.b16 %v281
        %v314 = vunpack.c.l.b16 %v282
        %v315 = vunpack.c.l.b16 %v283
        %v316 = vunpack.c.l.b16 %v284
        %v317 = vpack.c.b16 %v302, %v301
        %v318 = vpack.c.b16 %v304, %v303
        %v319 = vpack.c.b16 %v306, %v305
        %v320 = vpack.c.b16 %v308, %v307
        %v321 = vpack.c.b16 %v310, %v309
        %v322 = vpack.c.b16 %v312, %v311
        %v323 = vpack.c.b16 %v314, %v313
        %v324 = vpack.c.b16 %v316, %v315
        %333 = vmatprep.subr.bf16.mxu0 0
        %334 = vmatpush1.bf16.msra.mxu0 %v317
        %335 = vmatprep.subr.bf16.mxu0 0
        %336 = vmatpush1.bf16.msra.mxu0 %v318
        %337 = vmatprep.subr.bf16.mxu0 0
        %338 = vmatpush1.bf16.msra.mxu0 %v319
        %339 = vmatprep.subr.bf16.mxu0 0
        %340 = vmatpush1.bf16.msra.mxu0 %v320
        %341 = vmatprep.subr.bf16.mxu0 0
        %342 = vmatpush1.bf16.msra.mxu0 %v321
        %343 = vmatprep.subr.bf16.mxu0 0
        %344 = vmatpush1.bf16.msra.mxu0 %v322
        %345 = vmatprep.subr.bf16.mxu0 0
        %346 = vmatpush1.bf16.msra.mxu0 %v323
        %347 = vmatprep.subr.bf16.mxu0 0
        %348 = vmatpush1.bf16.msra.mxu0 %v324
        %349 = vmatprep.subr.bf16.mxu0 0
        %350 = vmatpush1.bf16.msra.mxu0 0
        %351 = vmatprep.subr.bf16.mxu0 0
        %352 = vmatpush1.bf16.msra.mxu0 0
        %353 = vmatprep.subr.bf16.mxu0 0
        %354 = vmatpush1.bf16.msra.mxu0 0
        %355 = vmatprep.subr.bf16.mxu0 0
        %356 = vmatpush1.bf16.msra.mxu0 0
        %357 = vmatprep.subr.bf16.mxu0 0
        %358 = vmatpush1.bf16.msra.mxu0 0
        %359 = vmatprep.subr.bf16.mxu0 0
        %360 = vmatpush1.bf16.msra.mxu0 0
        %361 = vmatprep.subr.bf16.mxu0 0
        %362 = vmatpush1.bf16.msra.mxu0 0
        %363 = vmatprep.subr.bf16.mxu0 0
        %364 = vmatpush1.bf16.msra.mxu0 0
        %365 = vmatprep.mubr.bf16.mxu0 0
        %366 = vmatmul.mubr.bf16.gmra.mrb[0].mxu0 %v268
        %v367 = vpop.f32.mrb[0].mxu0
        %v368 = vadd.f32 0.0, %v367
        %v369 = vpop.f32.mrb[0].mxu0
        %v370 = vpop.f32.mrb[0].mxu0
        %v371 = vadd.f32 0.0, %v370
        %v372 = vpop.f32.mrb[0].mxu0
        %373 = vdwg.mxu0
        %v374 = vadd.f32 %v264, %v368
        %v375 = vadd.f32 %v265, %v371
        %376 = vst [vmem:[#allocation2] sm:$0xff] %v374
        %377 = vst [vmem:[#allocation2 + $0x8] sm:$0xff] %v375
        // Predicated region
        $region45: #{tpu_custom_call.1} parent=31 // pred_check
          %p378 = pneg %p258
        $region46: #{tpu_custom_call.1} parent=31 // pred_check_branch
          %380 = sbr.rel (%p378) target = $region48
        $region47: #{tpu_custom_call.1} parent=31 // pred_region
          %v381 = vld [vmem:[#allocation2] sm:$0xff]
          %v382 = vld [vmem:[#allocation2 + $0x8] sm:$0xff]
          %v383 = vld [vmem:[%s255] sm:$0x1]
          %v385 = vlaneseq
          %v386 = vshrl.u32 %v385, 7
          %v387 = vsub.s32 0, %v386
          %v388 = vrot.slane %v383, %v387
          %v390 = vadd.f32 %v381, %v388
          %v391 = vadd.f32 %v382, %v388
          %v392 = vpack.c.bf16 %v391, %v390
          %v394 = vunpack.c.l.b16 %v392
          %v395 = vunpack.c.h.b16 %v392
          %v396 = vpack.c.b16 %v394, %v394
          %v397 = vpack.c.b16 %v395, %v395
          %400 = vst [vmem:[%s250] sm:$0xf] %v396
          %401 = vst [vmem:[%s250 + $0x4] sm:$0xf] %v397
        $region48: #{tpu_custom_call.1} parent=31 // pred_fallthru
          _
        %s402 = sand.u32 %s132, 1
        %s403 = scalar_lea.sflag [#allocation5], %s402
        %s404 = sand.u32 %s132, 1
        %s405 = smul.addr %s404, 8
        %s406 = scalar_lea.vmem [#allocation8], %s405
        // Predicated region
        $region49: #{tpu_custom_call.1} parent=31 // pred_check
          %p407 = pneg %p142
        $region50: #{tpu_custom_call.1} parent=31 // pred_check_branch
          %409 = sbr.rel (%p407) target = $region52
        $region51: #{tpu_custom_call.1} parent=31 // pred_region
          %s410 = smul.u32 2, %s26
          %s412 = ssub.s32 128, 128
          %413 = vsyncadd %s403, %s412
          %s414 = smul.addr %s410, 3
          %s415 = sadd.s32 %s27, %s414
          %s416 = smul.addr %s415, 64
          %s417 = scalar_lea.hbm %s3, %s416
          %s418 = sshll.u32 %s406, 4
          %s419 = int_to_ptr.vmem [resolvable:$true] %s418
          %424 = dma.vmem_to_hbm [thread:$0]  %s419, 128, %s417, %s403, 64, 192, 4
        $region52: #{tpu_custom_call.1} parent=31 // pred_fallthru
          _
      $region32: #{tpu_custom_call.1} parent=5 // pred_fallthru
        _
      %p425 = scmp.le.s32.totalorder 2, %s16
      // Predicated region
      $region53: #{tpu_custom_call.1} parent=5 // pred_check
        %p426 = pneg %p425
      $region54: #{tpu_custom_call.1} parent=5 // pred_check_branch
        %428 = sbr.rel (%p426) target = $region56
      $region55: #{tpu_custom_call.1} parent=5 // pred_region
        %s429 = ssub.s32 %s16, 2
        // Predicated region
        $region57: #{tpu_custom_call.1} parent=55 // pred_check
          %p430 = pneg %p148
        $region58: #{tpu_custom_call.1} parent=55 // pred_check_branch
          %432 = sbr.rel (%p430) target = $region60
        $region59: #{tpu_custom_call.1} parent=55 // pred_region
          %s433 = sand.u32 %s133, 1
          %s434 = scalar_lea.sflag [#allocation5], %s433
          %s435 = sand.u32 %s133, 1
          %s436 = smul.addr %s435, 8
          %s437 = scalar_lea.vmem [#allocation8], %s436
          %438 = dma.done %s434, 128
        $region60: #{tpu_custom_call.1} parent=55 // pred_fallthru
          _
      $region56: #{tpu_custom_call.1} parent=5 // pred_fallthru
        _
    $region6: #{tpu_custom_call.1} parent=1 // loop_footer
      %s20 = sadd.s32 1, %s16
    $region7: #{tpu_custom_call.1} parent=1 // loop_footer_branch
      %15 = sbr.rel target = $region3
    $region8: #{tpu_custom_call.1} parent=1 // loop_exit
      _
    %439 = vsyncpa [#allocation4], 1
    %s440 = scalar_lea.sflag [#allocation4], 1
    %441 = vsyncpa %s440, 1
    %442 = vsyncpa [#allocation7], 1
    %s443 = scalar_lea.sflag [#allocation7], 1
    %444 = vsyncpa %s443, 1
    %445 = vsyncpa [#allocation5], 1
    %s446 = scalar_lea.sflag [#allocation5], 1
    %447 = vsyncpa %s446, 1

</llo_original>
